<compile_context>
chip_gen: v5e
topology: v5e:2x2
jax: 0.10.0
libtpu: 0.0.40
codegen_flags: <defaults>
</compile_context>

<pallas_src>
import functools
import math

import jax
import jax.numpy as jnp
from jax import lax
from jax.experimental import pallas as pl
from jax.experimental.pallas import tpu as pltpu

_LANE = 512            # lane-dense last dim (multiple of 128 -> plain full-width stores)
_MAX_BLOCK_ROWS = 512  # (512, 512) f32 tile = 1 MiB/buffer; in+out double-buffered ~ 4 MiB


# ----------------------------------------------------------------------------------------
# Stateless counter-based Gaussian generator (pure jnp -> works in-kernel and in wrappers).
# ----------------------------------------------------------------------------------------
def _hash_u32(idx, seed_u32):
    """lowbias32-style integer hash: high-quality 32-bit stream from (flat index, seed)."""
    h = idx * jnp.uint32(0x9E3779B9)
    h = h ^ (seed_u32 * jnp.uint32(0x85EBCA6B) + jnp.uint32(0x6A09E667))
    h = h ^ (h >> 16)
    h = h * jnp.uint32(0x7FEB352D)
    h = h ^ (h >> 15)
    h = h * jnp.uint32(0x846CA68B)
    h = h ^ (h >> 16)
    return h


def _std_normal_from_bits(bits):
    """Map uniform uint32 words to ~N(0, 1) via inverse CDF (Giles' f32 erfinv polynomial).

    Only uses mul/add/xor/shift/log/sqrt/where, so it lowers on Mosaic TPU (log & sqrt go to
    the EUP slot; the polynomial is cheap VALU work) and in interpret/CPU fallback mode.
    """
    # Top 23 bits -> f32 in [1, 2) via the exponent trick (no int->float convert needed).
    f = lax.bitcast_convert_type((bits >> 9) | jnp.uint32(0x3F800000), jnp.float32)
    # Symmetric uniform in [-1 + 2^-23, 1 - 2^-23]  (keeps log(1 - x^2) finite).
    x = (f - 1.5) * 2.0 + jnp.float32(2.0 ** -23)

    w = -jnp.log((1.0 - x) * (1.0 + x))

    # Branch A (w < 5) and branch B (w >= 5) polynomials; both evaluated, then selected.
    wa = w - 2.5
    pa = jnp.float32(2.81022636e-08)
    for c in (3.43273939e-07, -3.5233877e-06, -4.39150654e-06, 0.00021858087,
              -0.00125372503, -0.00417768164, 0.246640727, 1.50140941):
        pa = jnp.float32(c) + pa * wa

    wb = jnp.sqrt(w) - 3.0
    pb = jnp.float32(-0.000200214257)
    for c in (0.000100950558, 0.00134934322, -0.00367342844, 0.00573950773,
              -0.0076224613, 0.00943887047, 1.00167406, 2.83297682):
        pb = jnp.float32(c) + pb * wb

    erfinv_x = jnp.where(w < 5.0, pa, pb) * x
    return jnp.float32(math.sqrt(2.0)) * erfinv_x     # standard normal


# ----------------------------------------------------------------------------------------
# Pallas kernel
# ----------------------------------------------------------------------------------------
def _gaussian_noise_kernel(seed_ref, x_ref, o_ref, *, std):
    """out = x + std * N(0, 1); noise generated in vregs from (seed, flat element index)."""
    rows, lanes = x_ref.shape
    seed_u = seed_ref[0].astype(jnp.uint32)
    row0 = (pl.program_id(0) * rows).astype(jnp.uint32)

    r = lax.broadcasted_iota(jnp.uint32, (rows, lanes), 0)
    c = lax.broadcasted_iota(jnp.uint32, (rows, lanes), 1)
    idx = (row0 + r) * jnp.uint32(lanes) + c          # global flat element index (mod 2^32)

    z = _std_normal_from_bits(_hash_u32(idx, seed_u))

    xv = x_ref[...].astype(jnp.float32)               # upcast only in vregs (dtype-native I/O)
    o_ref[...] = (xv + jnp.float32(std) * z).astype(o_ref.dtype)


def _choose_block_rows(n_rows: int) -> int:
    """Near-equal blocks, >=2 grid steps when possible (megacore balance), <=512 rows."""
    if n_rows <= 64:
        return n_rows                                  # single full-array block (grid = 1)
    n_blocks = max(2, -(-n_rows // _MAX_BLOCK_ROWS))
    br = -(-n_rows // n_blocks)                        # cdiv
    br = -(-br // 32) * 32                             # sublane-safe for f32 / bf16 / int8
    return min(br, n_rows)


def _add_noise_aligned(x2, seed_arr, std):
    """Run the Pallas kernel on a 512-lane-aligned (n_rows, 512) slab, dtype-native."""
    n_rows = x2.shape[0]
    block_rows = _choose_block_rows(n_rows)
    grid = (pl.cdiv(n_rows, block_rows),)
    kernel = functools.partial(_gaussian_noise_kernel, std=float(std))
    return pl.pallas_call(
        kernel,
        out_shape=jax.ShapeDtypeStruct(x2.shape, x2.dtype),
        grid_spec=pltpu.PrefetchScalarGridSpec(
            num_scalar_prefetch=1,                     # seed -> SMEM before the grid runs
            grid=grid,
            in_specs=[pl.BlockSpec((block_rows, _LANE), lambda i, seed: (i, 0))],
            out_specs=pl.BlockSpec((block_rows, _LANE), lambda i, seed: (i, 0)),
        ),
        compiler_params=pltpu.CompilerParams(
            dimension_semantics=("parallel",),         # rows independent -> megacore on v7x
        ),
    )(seed_arr, x2)


def gaussian_noise(x, seed, std=0.05):
    """Forward of GassianNoise: x + N(0, std^2) noise of x's shape (fresh draw per `seed`)."""
    orig_shape = x.shape
    dtype = x.dtype
    total = int(x.size)
    if total == 0:
        return x

    seed_arr = jnp.asarray(seed, dtype=jnp.int32).reshape((1,))
    flat = x.reshape(-1)

    n_full = total // _LANE
    aligned = n_full * _LANE

    pieces = []
    if n_full > 0:
        y2 = _add_noise_aligned(flat[:aligned].reshape(n_full, _LANE), seed_arr, std)
        pieces.append(y2.reshape(-1))
    if aligned < total:
        # < 512-element tail: same (seed, index) noise stream, evaluated with plain jnp.
        idx = jnp.arange(aligned, total, dtype=jnp.uint32)
        z = _std_normal_from_bits(_hash_u32(idx, seed_arr[0].astype(jnp.uint32)))
        tail = (flat[aligned:].astype(jnp.float32) + jnp.float32(std) * z).astype(dtype)
        pieces.append(tail)

    y = pieces[0] if len(pieces) == 1 else jnp.concatenate(pieces)
    return y.reshape(orig_shape)


# TODO(synk): the PyTorch module also mutates its registered buffer `noise2` in place each
# forward (driven by torch's global RNG state); JAX is functional, so that stateful side
# effect is replaced by the explicit `seed` argument.


if __name__ == "__main__":
    std = 0.05
    key = jax.random.PRNGKey(0)

    # Primary small example: batch=2, channels=4, 16x16 -> 2048 elements (512-aligned).
    x = jax.random.normal(key, (2, 4, 16, 16), dtype=jnp.float32)
    out = jax.block_until_ready(gaussian_noise(x, seed=123, std=std))
    assert out.shape == x.shape and out.dtype == x.dtype
    noise = out - x
    assert abs(float(jnp.mean(noise))) < 1e-2, float(jnp.mean(noise))
    assert abs(float(jnp.std(noise)) - std) < 1e-2, float(jnp.std(noise))

    # Deterministic in the seed; different seed -> different noise.
    out_again = jax.block_until_ready(gaussian_noise(x, seed=123, std=std))
    assert bool(jnp.array_equal(out, out_again))
    out_other = jax.block_until_ready(gaussian_noise(x, seed=7, std=std))
    assert float(jnp.max(jnp.abs(out_other - out))) > 1e-4

    # MNIST-like shape from the module spec (28*28 -> not 512-aligned, exercises tail path).
    x_mnist = jax.random.normal(jax.random.PRNGKey(1), (2, 1, 28, 28), dtype=jnp.float32)
    out_mnist = jax.block_until_ready(gaussian_noise(x_mnist, seed=11, std=std))
    assert out_mnist.shape == x_mnist.shape
    nm = out_mnist - x_mnist
    assert abs(float(jnp.mean(nm))) < 1e-2
    assert abs(float(jnp.std(nm)) - std) < 1e-2

    # Larger input to exercise the multi-step parallel grid (256 rows -> 2 blocks of 128).
    x_big = jax.random.normal(jax.random.PRNGKey(2), (32, 4, 32, 32), dtype=jnp.float32)
    out_big = jax.block_until_ready(gaussian_noise(x_big, seed=2024, std=std))
    nb = out_big - x_big
    assert abs(float(jnp.mean(nb))) < 2e-3
    assert abs(float(jnp.std(nb)) - std) < 2e-3

    # bf16 input stays bf16 end to end (dtype-generic I/O, no wrapper casts).
    x_bf = x.astype(jnp.bfloat16)
    out_bf = jax.block_until_ready(gaussian_noise(x_bf, seed=5, std=std))
    assert out_bf.dtype == jnp.bfloat16 and out_bf.shape == x_bf.shape
    nbf = out_bf.astype(jnp.float32) - x_bf.astype(jnp.float32)
    assert 0.03 < float(jnp.std(nbf)) < 0.07

    print("KERNEL_OK")
</pallas_src>

<mosaic_0001>
module attributes {stable_mosaic.version = 11 : i64} {
  func.func @_gaussian_noise_kernel(%arg0: i32, %arg1: memref<1xi32, #tpu.memory_space<smem>>, %arg2: memref<4x512xf32, #tpu.memory_space<vmem>>, %arg3: memref<4x512xf32, #tpu.memory_space<vmem>>) attributes {dimension_semantics = [#tpu.dimension_semantics<parallel>], iteration_bounds = array<i64: 1>, scalar_prefetch = 1 : i64, scratch_operands = 0 : i64, tpu.core_type = #tpu.core_type<tc>, window_params = [{transform_indices = @transform_0, window_bounds = array<i64: 4, 512>}, {transform_indices = @transform_1, window_bounds = array<i64: 4, 512>}]} {
    %c0 = arith.constant 0 : index
    %0 = memref.load %arg1[%c0] : memref<1xi32, #tpu.memory_space<smem>>
    %c4_i32 = arith.constant 4 : i32
    %1 = arith.muli %arg0, %c4_i32 : i32
    %2 = tpu.iota {dimensions = array<i32: 0>} : vector<4x512xi32>
    %3 = tpu.iota {dimensions = array<i32: 1>} : vector<4x512xi32>
    %4 = vector.broadcast %1 : i32 to vector<4x512xi32>
    %5 = arith.addi %4, %2 : vector<4x512xi32>
    %c512_i32 = arith.constant 512 : i32
    %6 = vector.broadcast %c512_i32 : i32 to vector<4x512xi32>
    %7 = arith.muli %5, %6 : vector<4x512xi32>
    %8 = arith.addi %7, %3 : vector<4x512xi32>
    %c-1640531527_i32 = arith.constant -1640531527 : i32
    %9 = vector.broadcast %c-1640531527_i32 : i32 to vector<4x512xi32>
    %10 = arith.muli %8, %9 : vector<4x512xi32>
    %c-2048144789_i32 = arith.constant -2048144789 : i32
    %11 = arith.muli %0, %c-2048144789_i32 : i32
    %c1779033703_i32 = arith.constant 1779033703 : i32
    %12 = arith.addi %11, %c1779033703_i32 : i32
    %13 = vector.broadcast %12 : i32 to vector<4x512xi32>
    %14 = arith.xori %10, %13 : vector<4x512xi32>
    %c16_i32 = arith.constant 16 : i32
    %15 = vector.broadcast %c16_i32 : i32 to vector<4x512xi32>
    %16 = arith.shrui %14, %15 : vector<4x512xi32>
    %17 = arith.xori %14, %16 : vector<4x512xi32>
    %c2146121005_i32 = arith.constant 2146121005 : i32
    %18 = vector.broadcast %c2146121005_i32 : i32 to vector<4x512xi32>
    %19 = arith.muli %17, %18 : vector<4x512xi32>
    %c15_i32 = arith.constant 15 : i32
    %20 = vector.broadcast %c15_i32 : i32 to vector<4x512xi32>
    %21 = arith.shrui %19, %20 : vector<4x512xi32>
    %22 = arith.xori %19, %21 : vector<4x512xi32>
    %c-2073254261_i32 = arith.constant -2073254261 : i32
    %23 = vector.broadcast %c-2073254261_i32 : i32 to vector<4x512xi32>
    %24 = arith.muli %22, %23 : vector<4x512xi32>
    %c16_i32_0 = arith.constant 16 : i32
    %25 = vector.broadcast %c16_i32_0 : i32 to vector<4x512xi32>
    %26 = arith.shrui %24, %25 : vector<4x512xi32>
    %27 = arith.xori %24, %26 : vector<4x512xi32>
    %c9_i32 = arith.constant 9 : i32
    %28 = vector.broadcast %c9_i32 : i32 to vector<4x512xi32>
    %29 = arith.shrui %27, %28 : vector<4x512xi32>
    %c1065353216_i32 = arith.constant 1065353216 : i32
    %30 = vector.broadcast %c1065353216_i32 : i32 to vector<4x512xi32>
    %31 = arith.ori %29, %30 : vector<4x512xi32>
    %32 = tpu.bitcast %31 : vector<4x512xi32> -> vector<4x512xf32>
    %cst = arith.constant 1.500000e+00 : f32
    %33 = vector.broadcast %cst : f32 to vector<4x512xf32>
    %34 = arith.subf %32, %33 : vector<4x512xf32>
    %cst_1 = arith.constant 2.000000e+00 : f32
    %35 = vector.broadcast %cst_1 : f32 to vector<4x512xf32>
    %36 = arith.mulf %34, %35 : vector<4x512xf32>
    %cst_2 = arith.constant 1.1920929E-7 : f32
    %37 = vector.broadcast %cst_2 : f32 to vector<4x512xf32>
    %38 = arith.addf %36, %37 : vector<4x512xf32>
    %cst_3 = arith.constant 1.000000e+00 : f32
    %39 = vector.broadcast %cst_3 : f32 to vector<4x512xf32>
    %40 = arith.subf %39, %38 : vector<4x512xf32>
    %cst_4 = arith.constant 1.000000e+00 : f32
    %41 = vector.broadcast %cst_4 : f32 to vector<4x512xf32>
    %42 = arith.addf %41, %38 : vector<4x512xf32>
    %43 = arith.mulf %40, %42 : vector<4x512xf32>
    %44 = math.log %43 : vector<4x512xf32>
    %cst_5 = arith.constant 0.000000e+00 : f32
    %45 = vector.broadcast %cst_5 : f32 to vector<4x512xf32>
    %46 = arith.subf %45, %44 : vector<4x512xf32>
    %cst_6 = arith.constant 2.500000e+00 : f32
    %47 = vector.broadcast %cst_6 : f32 to vector<4x512xf32>
    %48 = arith.subf %46, %47 : vector<4x512xf32>
    %cst_7 = arith.constant 2.81022636E-8 : f32
    %49 = vector.broadcast %cst_7 : f32 to vector<4x512xf32>
    %50 = arith.mulf %49, %48 : vector<4x512xf32>
    %cst_8 = arith.constant 3.43273939E-7 : f32
    %51 = vector.broadcast %cst_8 : f32 to vector<4x512xf32>
    %52 = arith.addf %51, %50 : vector<4x512xf32>
    %53 = arith.mulf %52, %48 : vector<4x512xf32>
    %cst_9 = arith.constant -3.5233877E-6 : f32
    %54 = vector.broadcast %cst_9 : f32 to vector<4x512xf32>
    %55 = arith.addf %54, %53 : vector<4x512xf32>
    %56 = arith.mulf %55, %48 : vector<4x512xf32>
    %cst_10 = arith.constant -4.39150654E-6 : f32
    %57 = vector.broadcast %cst_10 : f32 to vector<4x512xf32>
    %58 = arith.addf %57, %56 : vector<4x512xf32>
    %59 = arith.mulf %58, %48 : vector<4x512xf32>
    %cst_11 = arith.constant 2.1858087E-4 : f32
    %60 = vector.broadcast %cst_11 : f32 to vector<4x512xf32>
    %61 = arith.addf %60, %59 : vector<4x512xf32>
    %62 = arith.mulf %61, %48 : vector<4x512xf32>
    %cst_12 = arith.constant -0.00125372503 : f32
    %63 = vector.broadcast %cst_12 : f32 to vector<4x512xf32>
    %64 = arith.addf %63, %62 : vector<4x512xf32>
    %65 = arith.mulf %64, %48 : vector<4x512xf32>
    %cst_13 = arith.constant -0.00417768164 : f32
    %66 = vector.broadcast %cst_13 : f32 to vector<4x512xf32>
    %67 = arith.addf %66, %65 : vector<4x512xf32>
    %68 = arith.mulf %67, %48 : vector<4x512xf32>
    %cst_14 = arith.constant 0.246640727 : f32
    %69 = vector.broadcast %cst_14 : f32 to vector<4x512xf32>
    %70 = arith.addf %69, %68 : vector<4x512xf32>
    %71 = arith.mulf %70, %48 : vector<4x512xf32>
    %cst_15 = arith.constant 1.50140941 : f32
    %72 = vector.broadcast %cst_15 : f32 to vector<4x512xf32>
    %73 = arith.addf %72, %71 : vector<4x512xf32>
    %74 = math.sqrt %46 : vector<4x512xf32>
    %cst_16 = arith.constant 3.000000e+00 : f32
    %75 = vector.broadcast %cst_16 : f32 to vector<4x512xf32>
    %76 = arith.subf %74, %75 : vector<4x512xf32>
    %cst_17 = arith.constant -2.00214257E-4 : f32
    %77 = vector.broadcast %cst_17 : f32 to vector<4x512xf32>
    %78 = arith.mulf %77, %76 : vector<4x512xf32>
    %cst_18 = arith.constant 1.00950558E-4 : f32
    %79 = vector.broadcast %cst_18 : f32 to vector<4x512xf32>
    %80 = arith.addf %79, %78 : vector<4x512xf32>
    %81 = arith.mulf %80, %76 : vector<4x512xf32>
    %cst_19 = arith.constant 0.00134934322 : f32
    %82 = vector.broadcast %cst_19 : f32 to vector<4x512xf32>
    %83 = arith.addf %82, %81 : vector<4x512xf32>
    %84 = arith.mulf %83, %76 : vector<4x512xf32>
    %cst_20 = arith.constant -0.00367342844 : f32
    %85 = vector.broadcast %cst_20 : f32 to vector<4x512xf32>
    %86 = arith.addf %85, %84 : vector<4x512xf32>
    %87 = arith.mulf %86, %76 : vector<4x512xf32>
    %cst_21 = arith.constant 0.00573950773 : f32
    %88 = vector.broadcast %cst_21 : f32 to vector<4x512xf32>
    %89 = arith.addf %88, %87 : vector<4x512xf32>
    %90 = arith.mulf %89, %76 : vector<4x512xf32>
    %cst_22 = arith.constant -0.0076224613 : f32
    %91 = vector.broadcast %cst_22 : f32 to vector<4x512xf32>
    %92 = arith.addf %91, %90 : vector<4x512xf32>
    %93 = arith.mulf %92, %76 : vector<4x512xf32>
    %cst_23 = arith.constant 0.00943887047 : f32
    %94 = vector.broadcast %cst_23 : f32 to vector<4x512xf32>
    %95 = arith.addf %94, %93 : vector<4x512xf32>
    %96 = arith.mulf %95, %76 : vector<4x512xf32>
    %cst_24 = arith.constant 1.00167406 : f32
    %97 = vector.broadcast %cst_24 : f32 to vector<4x512xf32>
    %98 = arith.addf %97, %96 : vector<4x512xf32>
    %99 = arith.mulf %98, %76 : vector<4x512xf32>
    %cst_25 = arith.constant 2.83297682 : f32
    %100 = vector.broadcast %cst_25 : f32 to vector<4x512xf32>
    %101 = arith.addf %100, %99 : vector<4x512xf32>
    %cst_26 = arith.constant 5.000000e+00 : f32
    %102 = vector.broadcast %cst_26 : f32 to vector<4x512xf32>
    %103 = arith.cmpf olt, %46, %102 : vector<4x512xf32>
    %104 = arith.select %103, %73, %101 : vector<4x512xi1>, vector<4x512xf32>
    %105 = arith.mulf %104, %38 : vector<4x512xf32>
    %cst_27 = arith.constant 1.41421354 : f32
    %106 = vector.broadcast %cst_27 : f32 to vector<4x512xf32>
    %107 = arith.mulf %106, %105 : vector<4x512xf32>
    %c0_28 = arith.constant 0 : index
    %c0_29 = arith.constant 0 : index
    %108 = vector.load %arg2[%c0_28, %c0_29] : memref<4x512xf32, #tpu.memory_space<vmem>>, vector<4x512xf32>
    %cst_30 = arith.constant 5.000000e-02 : f32
    %109 = vector.broadcast %cst_30 : f32 to vector<4x512xf32>
    %110 = arith.mulf %109, %107 : vector<4x512xf32>
    %111 = arith.addf %108, %110 : vector<4x512xf32>
    %c0_31 = arith.constant 0 : index
    %c0_32 = arith.constant 0 : index
    %112 = vector.load %arg3[%c0_31, %c0_32] : memref<4x512xf32, #tpu.memory_space<vmem>>, vector<4x512xf32>
    tpu.vector_store %arg3[%c0_31, %c0_32], %111 {strides = array<i32>} : memref<4x512xf32, #tpu.memory_space<vmem>>, vector<4x512xf32>,
    return
  }
  func.func @transform_0(%arg0: i32, %arg1: memref<1xi32, #tpu.memory_space<smem>>) -> (i32, i32) {
    %c0_i32 = arith.constant 0 : i32
    %c0_i32_0 = arith.constant 0 : i32
    return %arg0, %c0_i32 : i32, i32
  }
  func.func @transform_1(%arg0: i32, %arg1: memref<1xi32, #tpu.memory_space<smem>>) -> (i32, i32) {
    %c0_i32 = arith.constant 0 : i32
    %c0_i32_0 = arith.constant 0 : i32
    return %arg0, %c0_i32 : i32, i32
  }
}

</mosaic_0001>

<llo_original>
// kernel: tpu_custom_call.1
$region0: #{tpu_custom_call.1}
  #allocation0 [shape = 'u32[]', space=smem, size = 0x4, offset = 0x4, fixed_abs, tag = 'smem constant byte address 0x4 - core index']
  #allocation1 [shape = 'u32[72,128]{1,0:T(1,128)}', space=vmem, size = 0x9000, scoped, tag = 'internal scratch']
  #allocation2 [shape = 's32[1]{0}', space=sflag, size = 0x4, scoped, tag = 'scoped memory for tpu_custom_call.1']
  #allocation3 [shape = 's32[1]{0:T(128)S(6)}', space=smem, size = 0x200, scoped, tag = 'prefetched SMEM operand 0']
  %s0 = inlined_call_operand.<no memory space> [shape: s32[1], index: 0, kind: input, shape index: {}]
  %s1 = inlined_call_operand.hbm [shape: f32[4,512], index: 1, kind: input, shape index: {}]
  %s2 = inlined_call_operand.hbm [shape: f32[4,512], index: 2, kind: output, shape index: {}]
  %s3 = sld [smem:[#allocation0]]
  $region18: #{tpu_custom_call.1} parent=0
    _
  %s5 = ssub.s32 1, %s3
  %s6 = scalar_select 0, %s5, %s3
  %7 = sst [smem:[#allocation3]] %s0
  $region1: #{tpu_custom_call.1} parent=0
    #allocation4 [shape = 'u8[8192]{0}', space=vmem, size = 0x2000, scoped, tag = 'input window, operand 1, single buffered']
    #allocation5 [shape = 's32[1]{0}', space=sflag, size = 0x4, scoped, tag = 'scoped memory for tpu_custom_call.1']
    #allocation6 [shape = 's32[1]{0}', space=sflag, size = 0x4, scoped, tag = 'scoped memory for tpu_custom_call.1']
    #allocation7 [shape = 'u8[8192]{0}', space=vmem, size = 0x2000, scoped, tag = 'output window, operand 0, single buffered']
    %8 = vsyncpa [#allocation5], 0
    %9 = vsyncpa [#allocation6], 0
    // Predicated region
    $region2: #{tpu_custom_call.1} parent=1 // pred_check
      _
    $region3: #{tpu_custom_call.1} parent=1 // pred_check_branch
      %11 = sbr.rel (0) target = $region5
    $region4: #{tpu_custom_call.1} parent=1 // pred_region
      %13 = vsyncadd [#allocation5], 0
      %s15 = sshll.u32 %s1, 4
      %s16 = int_to_ptr.hbm [resolvable:$true] %s15
      %s17 = sshll.u32 [#allocation4], 4
      %s18 = int_to_ptr.vmem [resolvable:$true] %s17
      %20 = dma.hbm_to_vmem [thread:$0]  %s16, 256, %s18, [#allocation5]
    $region5: #{tpu_custom_call.1} parent=1 // pred_fallthru
      _
    // Predicated region
    $region6: #{tpu_custom_call.1} parent=1 // pred_check
      _
    $region7: #{tpu_custom_call.1} parent=1 // pred_check_branch
      %22 = sbr.rel (0) target = $region9
    $region8: #{tpu_custom_call.1} parent=1 // pred_region
      %24 = dma.done [#allocation5], 256
    $region9: #{tpu_custom_call.1} parent=1 // pred_fallthru
      _
    %s25 = sld [smem:[#allocation3]]
    %s26 = smul.u32 0, 4
    %v27 = vlaneseq
    %v28 = vshrl.u32 %v27, 7
    %v29 = vlaneseq
    %v30 = vand.u32 %v29, 127
    %v31 = vadd.s32 %v30, 128
    %v32 = vadd.s32 %v30, 256
    %v33 = vadd.s32 %v30, 384
    %v34 = vstv %s26
    %v35 = vadd.s32 %v34, %v28
    %v36 = vmul.u32 %v35, 512
    %v37 = vadd.s32 %v36, %v30
    %v38 = vadd.s32 %v36, %v31
    %v39 = vadd.s32 %v36, %v32
    %v40 = vadd.s32 %v36, %v33
    %v41 = vmul.u32 %v37, 2654435769
    %v42 = vmul.u32 %v38, 2654435769
    %v43 = vmul.u32 %v39, 2654435769
    %v44 = vmul.u32 %v40, 2654435769
    %s45 = smul.u32 %s25, 2246822507
    %s46 = sadd.s32 %s45, 1779033703
    %v47 = vstv %s46
    %v48 = vxor.u32 %v41, %v47
    %v49 = vxor.u32 %v42, %v47
    %v50 = vxor.u32 %v43, %v47
    %v51 = vxor.u32 %v44, %v47
    %v52 = vshrl.u32 %v48, 16
    %v53 = vshrl.u32 %v49, 16
    %v54 = vshrl.u32 %v50, 16
    %v55 = vshrl.u32 %v51, 16
    %v56 = vxor.u32 %v48, %v52
    %v57 = vxor.u32 %v49, %v53
    %v58 = vxor.u32 %v50, %v54
    %v59 = vxor.u32 %v51, %v55
    %v60 = vmul.u32 %v56, 2146121005
    %v61 = vmul.u32 %v57, 2146121005
    %v62 = vmul.u32 %v58, 2146121005
    %v63 = vmul.u32 %v59, 2146121005
    %v64 = vshrl.u32 %v60, 15
    %v65 = vshrl.u32 %v61, 15
    %v66 = vshrl.u32 %v62, 15
    %v67 = vshrl.u32 %v63, 15
    %v68 = vxor.u32 %v60, %v64
    %v69 = vxor.u32 %v61, %v65
    %v70 = vxor.u32 %v62, %v66
    %v71 = vxor.u32 %v63, %v67
    %v72 = vmul.u32 %v68, 2221713035
    %v73 = vmul.u32 %v69, 2221713035
    %v74 = vmul.u32 %v70, 2221713035
    %v75 = vmul.u32 %v71, 2221713035
    %v76 = vshrl.u32 %v72, 16
    %v77 = vshrl.u32 %v73, 16
    %v78 = vshrl.u32 %v74, 16
    %v79 = vshrl.u32 %v75, 16
    %v80 = vxor.u32 %v72, %v76
    %v81 = vxor.u32 %v73, %v77
    %v82 = vxor.u32 %v74, %v78
    %v83 = vxor.u32 %v75, %v79
    %v84 = vshrl.u32 %v80, 9
    %v85 = vshrl.u32 %v81, 9
    %v86 = vshrl.u32 %v82, 9
    %v87 = vshrl.u32 %v83, 9
    %v88 = vor.u32 %v84, 1065353216
    %v89 = vor.u32 %v85, 1065353216
    %v90 = vor.u32 %v86, 1065353216
    %v91 = vor.u32 %v87, 1065353216
    %v96 = vsub.f32 %v88, 1.5
    %v97 = vsub.f32 %v89, 1.5
    %v98 = vsub.f32 %v90, 1.5
    %v99 = vsub.f32 %v91, 1.5
    %v100 = vmul.f32 %v96, 2.0
    %v101 = vmul.f32 %v97, 2.0
    %v102 = vmul.f32 %v98, 2.0
    %v103 = vmul.f32 %v99, 2.0
    %v104 = vadd.f32 %v100, 1.1920929e-07
    %v105 = vadd.f32 %v101, 1.1920929e-07
    %v106 = vadd.f32 %v102, 1.1920929e-07
    %v107 = vadd.f32 %v103, 1.1920929e-07
    %v108 = vsub.f32 1.0, %v104
    %v109 = vsub.f32 1.0, %v105
    %v110 = vsub.f32 1.0, %v106
    %v111 = vsub.f32 1.0, %v107
    %v112 = vadd.f32 %v104, 1.0
    %v113 = vadd.f32 %v105, 1.0
    %v114 = vadd.f32 %v106, 1.0
    %v115 = vadd.f32 %v107, 1.0
    %v116 = vmul.f32 %v108, %v112
    %v117 = vmul.f32 %v109, %v113
    %v118 = vmul.f32 %v110, %v114
    %v119 = vmul.f32 %v111, %v115
    %v120 = vlog2.pop %v116
    %v121 = vmul.f32 %v120, 0.6931472
    %v122 = vlog2.pop %v117
    %v123 = vmul.f32 %v122, 0.6931472
    %v124 = vlog2.pop %v118
    %v125 = vmul.f32 %v124, 0.6931472
    %v126 = vlog2.pop %v119
    %v127 = vmul.f32 %v126, 0.6931472
    %v128 = vsub.f32 0.0, %v121
    %v129 = vsub.f32 0.0, %v123
    %v130 = vsub.f32 0.0, %v125
    %v131 = vsub.f32 0.0, %v127
    %v132 = vsub.f32 %v128, 2.5
    %v133 = vsub.f32 %v129, 2.5
    %v134 = vsub.f32 %v130, 2.5
    %v135 = vsub.f32 %v131, 2.5
    %v136 = vmul.f32 %v132, 2.8102264e-08
    %v137 = vmul.f32 %v133, 2.8102264e-08
    %v138 = vmul.f32 %v134, 2.8102264e-08
    %v139 = vmul.f32 %v135, 2.8102264e-08
    %v140 = vadd.f32 %v136, 3.4327394e-07
    %v141 = vadd.f32 %v137, 3.4327394e-07
    %v142 = vadd.f32 %v138, 3.4327394e-07
    %v143 = vadd.f32 %v139, 3.4327394e-07
    %v144 = vmul.f32 %v140, %v132
    %v145 = vmul.f32 %v141, %v133
    %v146 = vmul.f32 %v142, %v134
    %v147 = vmul.f32 %v143, %v135
    %v148 = vadd.f32 %v144, -3.5233877e-06
    %v149 = vadd.f32 %v145, -3.5233877e-06
    %v150 = vadd.f32 %v146, -3.5233877e-06
    %v151 = vadd.f32 %v147, -3.5233877e-06
    %v152 = vmul.f32 %v148, %v132
    %v153 = vmul.f32 %v149, %v133
    %v154 = vmul.f32 %v150, %v134
    %v155 = vmul.f32 %v151, %v135
    %v156 = vadd.f32 %v152, -4.3915065e-06
    %v157 = vadd.f32 %v153, -4.3915065e-06
    %v158 = vadd.f32 %v154, -4.3915065e-06
    %v159 = vadd.f32 %v155, -4.3915065e-06
    %v160 = vmul.f32 %v156, %v132
    %v161 = vmul.f32 %v157, %v133
    %v162 = vmul.f32 %v158, %v134
    %v163 = vmul.f32 %v159, %v135
    %v164 = vadd.f32 %v160, 0.00021858087
    %v165 = vadd.f32 %v161, 0.00021858087
    %v166 = vadd.f32 %v162, 0.00021858087
    %v167 = vadd.f32 %v163, 0.00021858087
    %v168 = vmul.f32 %v164, %v132
    %v169 = vmul.f32 %v165, %v133
    %v170 = vmul.f32 %v166, %v134
    %v171 = vmul.f32 %v167, %v135
    %v172 = vadd.f32 %v168, -0.001253725
    %v173 = vadd.f32 %v169, -0.001253725
    %v174 = vadd.f32 %v170, -0.001253725
    %v175 = vadd.f32 %v171, -0.001253725
    %v176 = vmul.f32 %v172, %v132
    %v177 = vmul.f32 %v173, %v133
    %v178 = vmul.f32 %v174, %v134
    %v179 = vmul.f32 %v175, %v135
    %v180 = vadd.f32 %v176, -0.0041776816
    %v181 = vadd.f32 %v177, -0.0041776816
    %v182 = vadd.f32 %v178, -0.0041776816
    %v183 = vadd.f32 %v179, -0.0041776816
    %v184 = vmul.f32 %v180, %v132
    %v185 = vmul.f32 %v181, %v133
    %v186 = vmul.f32 %v182, %v134
    %v187 = vmul.f32 %v183, %v135
    %v188 = vadd.f32 %v184, 0.24664073
    %v189 = vadd.f32 %v185, 0.24664073
    %v190 = vadd.f32 %v186, 0.24664073
    %v191 = vadd.f32 %v187, 0.24664073
    %v192 = vmul.f32 %v188, %v132
    %v193 = vmul.f32 %v189, %v133
    %v194 = vmul.f32 %v190, %v134
    %v195 = vmul.f32 %v191, %v135
    %v196 = vadd.f32 %v192, 1.5014094
    %v197 = vadd.f32 %v193, 1.5014094
    %v198 = vadd.f32 %v194, 1.5014094
    %v199 = vadd.f32 %v195, 1.5014094
    %v200 = vrsqrt.pop %v128
    %v201 = vmul.f32 %v200, %v128
    %v202 = vmul.f32 %v201, %v200
    %v203 = vmul.f32 0.5, %v202
    %v204 = vsub.f32 1.5, %v203
    %v205 = vmul.f32 %v200, %v204
    %v206 = vmul.f32 %v128, %v205
    %vm207 = vcmp.eq.f32.partialorder %v128, inf
    %v208 = vsel %vm207, %v128, %v206
    %vm209 = vcmp.eq.f32.partialorder %v128, 0.0
    %v210 = vand.u32 %v128, 2147483648
    %v211 = vsel %vm209, %v210, %v208
    %v212 = vrsqrt.pop %v129
    %v213 = vmul.f32 %v212, %v129
    %v214 = vmul.f32 %v213, %v212
    %v215 = vmul.f32 0.5, %v214
    %v216 = vsub.f32 1.5, %v215
    %v217 = vmul.f32 %v212, %v216
    %v218 = vmul.f32 %v129, %v217
    %vm219 = vcmp.eq.f32.partialorder %v129, inf
    %v220 = vsel %vm219, %v129, %v218
    %vm221 = vcmp.eq.f32.partialorder %v129, 0.0
    %v222 = vand.u32 %v129, 2147483648
    %v223 = vsel %vm221, %v222, %v220
    %v224 = vrsqrt.pop %v130
    %v225 = vmul.f32 %v224, %v130
    %v226 = vmul.f32 %v225, %v224
    %v227 = vmul.f32 0.5, %v226
    %v228 = vsub.f32 1.5, %v227
    %v229 = vmul.f32 %v224, %v228
    %v230 = vmul.f32 %v130, %v229
    %vm231 = vcmp.eq.f32.partialorder %v130, inf
    %v232 = vsel %vm231, %v130, %v230
    %vm233 = vcmp.eq.f32.partialorder %v130, 0.0
    %v234 = vand.u32 %v130, 2147483648
    %v235 = vsel %vm233, %v234, %v232
    %v236 = vrsqrt.pop %v131
    %v237 = vmul.f32 %v236, %v131
    %v238 = vmul.f32 %v237, %v236
    %v239 = vmul.f32 0.5, %v238
    %v240 = vsub.f32 1.5, %v239
    %v241 = vmul.f32 %v236, %v240
    %v242 = vmul.f32 %v131, %v241
    %vm243 = vcmp.eq.f32.partialorder %v131, inf
    %v244 = vsel %vm243, %v131, %v242
    %vm245 = vcmp.eq.f32.partialorder %v131, 0.0
    %v246 = vand.u32 %v131, 2147483648
    %v247 = vsel %vm245, %v246, %v244
    %v248 = vsub.f32 %v211, 3.0
    %v249 = vsub.f32 %v223, 3.0
    %v250 = vsub.f32 %v235, 3.0
    %v251 = vsub.f32 %v247, 3.0
    %v252 = vmul.f32 %v248, -0.00020021426
    %v253 = vmul.f32 %v249, -0.00020021426
    %v254 = vmul.f32 %v250, -0.00020021426
    %v255 = vmul.f32 %v251, -0.00020021426
    %v256 = vadd.f32 %v252, 0.00010095056
    %v257 = vadd.f32 %v253, 0.00010095056
    %v258 = vadd.f32 %v254, 0.00010095056
    %v259 = vadd.f32 %v255, 0.00010095056
    %v260 = vmul.f32 %v256, %v248
    %v261 = vmul.f32 %v257, %v249
    %v262 = vmul.f32 %v258, %v250
    %v263 = vmul.f32 %v259, %v251
    %v264 = vadd.f32 %v260, 0.0013493432
    %v265 = vadd.f32 %v261, 0.0013493432
    %v266 = vadd.f32 %v262, 0.0013493432
    %v267 = vadd.f32 %v263, 0.0013493432
    %v268 = vmul.f32 %v264, %v248
    %v269 = vmul.f32 %v265, %v249
    %v270 = vmul.f32 %v266, %v250
    %v271 = vmul.f32 %v267, %v251
    %v272 = vadd.f32 %v268, -0.0036734284
    %v273 = vadd.f32 %v269, -0.0036734284
    %v274 = vadd.f32 %v270, -0.0036734284
    %v275 = vadd.f32 %v271, -0.0036734284
    %v276 = vmul.f32 %v272, %v248
    %v277 = vmul.f32 %v273, %v249
    %v278 = vmul.f32 %v274, %v250
    %v279 = vmul.f32 %v275, %v251
    %v280 = vadd.f32 %v276, 0.0057395077
    %v281 = vadd.f32 %v277, 0.0057395077
    %v282 = vadd.f32 %v278, 0.0057395077
    %v283 = vadd.f32 %v279, 0.0057395077
    %v284 = vmul.f32 %v280, %v248
    %v285 = vmul.f32 %v281, %v249
    %v286 = vmul.f32 %v282, %v250
    %v287 = vmul.f32 %v283, %v251
    %v288 = vadd.f32 %v284, -0.0076224613
    %v289 = vadd.f32 %v285, -0.0076224613
    %v290 = vadd.f32 %v286, -0.0076224613
    %v291 = vadd.f32 %v287, -0.0076224613
    %v292 = vmul.f32 %v288, %v248
    %v293 = vmul.f32 %v289, %v249
    %v294 = vmul.f32 %v290, %v250
    %v295 = vmul.f32 %v291, %v251
    %v296 = vadd.f32 %v292, 0.0094388705
    %v297 = vadd.f32 %v293, 0.0094388705
    %v298 = vadd.f32 %v294, 0.0094388705
    %v299 = vadd.f32 %v295, 0.0094388705
    %v300 = vmul.f32 %v296, %v248
    %v301 = vmul.f32 %v297, %v249
    %v302 = vmul.f32 %v298, %v250
    %v303 = vmul.f32 %v299, %v251
    %v304 = vadd.f32 %v300, 1.001674
    %v305 = vadd.f32 %v301, 1.001674
    %v306 = vadd.f32 %v302, 1.001674
    %v307 = vadd.f32 %v303, 1.001674
    %v308 = vmul.f32 %v304, %v248
    %v309 = vmul.f32 %v305, %v249
    %v310 = vmul.f32 %v306, %v250
    %v311 = vmul.f32 %v307, %v251
    %v312 = vadd.f32 %v308, 2.8329768
    %v313 = vadd.f32 %v309, 2.8329768
    %v314 = vadd.f32 %v310, 2.8329768
    %v315 = vadd.f32 %v311, 2.8329768
    %vm316 = vcmp.lt.f32.partialorder %v128, 5.0
    %vm317 = vcmp.lt.f32.partialorder %v129, 5.0
    %vm318 = vcmp.lt.f32.partialorder %v130, 5.0
    %vm319 = vcmp.lt.f32.partialorder %v131, 5.0
    %v320 = vsel %vm316, %v196, %v312
    %v321 = vsel %vm317, %v197, %v313
    %v322 = vsel %vm318, %v198, %v314
    %v323 = vsel %vm319, %v199, %v315
    %v324 = vmul.f32 %v320, %v104
    %v325 = vmul.f32 %v321, %v105
    %v326 = vmul.f32 %v322, %v106
    %v327 = vmul.f32 %v323, %v107
    %v328 = vmul.f32 %v324, 1.4142135
    %v329 = vmul.f32 %v325, 1.4142135
    %v330 = vmul.f32 %v326, 1.4142135
    %v331 = vmul.f32 %v327, 1.4142135
    %v332 = vld [vmem:[#allocation4] sm:$0xff]
    %v333 = vld [vmem:[#allocation4 + $0x8] sm:$0xff]
    %v334 = vmul.f32 %v328, 0.05
    %v335 = vmul.f32 %v329, 0.05
    %v336 = vmul.f32 %v330, 0.05
    %v337 = vmul.f32 %v331, 0.05
    %v342 = vrot.slane %v335, 4
    %v343 = vrot.slane %v337, 4
    %vm344 = vcmask 1043456
    %v345 = vsel %vm344, %v334, %v342
    %v346 = vsel %vm344, %v336, %v343
    %v349 = vadd.f32 %v332, %v345
    %v350 = vadd.f32 %v333, %v346
    %351 = vst [vmem:[#allocation7] sm:$0xff] %v349
    %352 = vst [vmem:[#allocation7 + $0x8] sm:$0xff] %v350
    // Predicated region
    $region10: #{tpu_custom_call.1} parent=1 // pred_check
      _
    $region11: #{tpu_custom_call.1} parent=1 // pred_check_branch
      %354 = sbr.rel (0) target = $region13
    $region12: #{tpu_custom_call.1} parent=1 // pred_region
      %356 = vsyncadd [#allocation6], 0
      %s358 = sshll.u32 [#allocation7], 4
      %s359 = int_to_ptr.vmem [resolvable:$true] %s358
      %s360 = sshll.u32 %s2, 4
      %s361 = int_to_ptr.hbm [resolvable:$true] %s360
      %363 = dma.vmem_to_hbm [thread:$0]  %s359, 256, %s361, [#allocation6]
    $region13: #{tpu_custom_call.1} parent=1 // pred_fallthru
      _
    // Predicated region
    $region14: #{tpu_custom_call.1} parent=1 // pred_check
      _
    $region15: #{tpu_custom_call.1} parent=1 // pred_check_branch
      %365 = sbr.rel (0) target = $region17
    $region16: #{tpu_custom_call.1} parent=1 // pred_region
      %367 = dma.done [#allocation6], 256
    $region17: #{tpu_custom_call.1} parent=1 // pred_fallthru
      _
    %368 = vsyncpa [#allocation5], 1
    %369 = vsyncpa [#allocation6], 1

</llo_original>
